<compile_context>
chip_gen: v7x
topology: tpu7x:2x2x1
jax: 0.10.0
libtpu: 0.0.40
codegen_flags: <defaults>
</compile_context>

<pallas_src>
import functools

import jax
import jax.numpy as jnp
from jax import lax
from jax.experimental import pallas as pl
from jax.experimental.pallas import tpu as pltpu

HIDDEN = 500      # module's self.hidden_size / Linear(500, 500)
H_PAD = 512       # lane-aligned hidden (multiple of 128)


def _round_up(x, n):
    return (x + n - 1) // n * n


def prepare_params(w, b, weight_dtype=jnp.bfloat16):
    """One-time parameter prep (hoisted out of the per-call path).

    w : [500, 500] nn.Linear weight stored pre-transposed as W[in, out]
    b : [1, 500]   bias
    Returns ([512, 512] weight in `weight_dtype`, [1, 512] f32 bias), both
    zero-padded so every MXU K/N tile is a clean multiple of 128 lanes.
    """
    w_p = jnp.pad(w, ((0, H_PAD - HIDDEN), (0, H_PAD - HIDDEN))).astype(weight_dtype)
    b_p = jnp.pad(b.astype(jnp.float32), ((0, 0), (0, H_PAD - HIDDEN)))
    return w_p, b_p


def remote_model_kernel(x2_ref, xi_ref, w_ref, b_ref, out_ref, xs_ref,
                        *, m, p, n2, off_i):
    # x2_ref : [N2, 500] f32   full output_2d
    # xi_ref : [M,  500] f32   output_i
    # w_ref  : [512, 512]      padded weight (bf16 by default)
    # b_ref  : [1, 512]  f32   padded bias
    # out    : [M, P]    f32
    # xs_ref : [R, 512]  f32   VMEM scratch: stacked + lane-padded activations

    # Build the stacked activation block at sublane-aligned row offsets:
    #   rows [0, n2)           <- output_2d
    #   rows [off_i, off_i+m)  <- output_i        (off_i = round_up(n2, 8))
    # Zero-fill first so the lane pad (cols 500:512) and row pad are exact 0s.
    xs_ref[...] = jnp.zeros_like(xs_ref)
    xs_ref[0:n2, 0:HIDDEN] = x2_ref[...]
    xs_ref[off_i:off_i + m, 0:HIDDEN] = xi_ref[...]

    # One fused Linear over all rows: bf16 MXU operands, f32 accumulation,
    # bias-add + ReLU in f32 (v5e-safe).  Padded hidden cols give relu(0)=0.
    x = xs_ref[...].astype(w_ref.dtype)
    h = jnp.dot(x, w_ref[...], preferred_element_type=jnp.float32) + b_ref[...]
    h = jnp.maximum(h, 0.0)                                      # [R, 512] f32

    # Full gram over the aligned rows (one tiny MXU op), then slice only the
    # [m, p] corner of the [R, R] result -> no unaligned sublane slicing of
    # the 512-wide activation.  Padded / unused rows (whose h = relu(b) != 0)
    # are discarded by this slice before the softmax.
    hb = h.astype(w_ref.dtype)
    g = lax.dot_general(hb, hb,
                        dimension_numbers=(((1,), (1,)), ((), ())),
                        preferred_element_type=jnp.float32)      # [R, R]
    mm = g[off_i:off_i + m, 0:p]                                 # [M, P]

    # log_softmax over dim=1 (f32).
    row_max = jnp.max(mm, axis=1, keepdims=True)
    shifted = mm - row_max
    lse = jnp.log(jnp.sum(jnp.exp(shifted), axis=1, keepdims=True))
    out_ref[...] = shifted - lse


def remote_model(output_i, output_2d, index, w_p, b_p):
    """index is a static Python int (mirrors the host-side slice in PyTorch)."""
    M, H = output_i.shape
    N2, H2 = output_2d.shape
    assert H == HIDDEN and H2 == HIDDEN
    P = index + 1
    assert 1 <= P <= N2
    off_i = _round_up(N2, 8)          # sublane-aligned slot for output_i rows
    R = _round_up(off_i + M, 8)       # stacked row count (sublane-aligned)

    kernel = functools.partial(remote_model_kernel, m=M, p=P, n2=N2, off_i=off_i)
    return pl.pallas_call(
        kernel,
        out_shape=jax.ShapeDtypeStruct((M, P), jnp.float32),
        in_specs=[
            pl.BlockSpec((N2, HIDDEN), lambda: (0, 0)),   # full output_2d
            pl.BlockSpec((M, HIDDEN), lambda: (0, 0)),    # output_i
            pl.BlockSpec((H_PAD, H_PAD), lambda: (0, 0)), # padded weight
            pl.BlockSpec((1, H_PAD), lambda: (0, 0)),     # padded bias
        ],
        out_specs=pl.BlockSpec((M, P), lambda: (0, 0)),
        scratch_shapes=[pltpu.VMEM((R, H_PAD), jnp.float32)],
        compiler_params=pltpu.CompilerParams(vmem_limit_bytes=16 << 20),
    )(output_2d, output_i, w_p, b_p)


def _reference(output_i, output_2d, index, w, b, matmul_dtype):
    """Pure-JAX reference.  matmul_dtype=bf16 matches the kernel's MXU
    numerics exactly; matmul_dtype=f32 is the exact PyTorch-f32 semantics."""
    x2d = output_2d[: index + 1]
    wd = w.astype(matmul_dtype)

    def lin(x):
        h = jnp.dot(x.astype(matmul_dtype), wd,
                    preferred_element_type=jnp.float32,
                    precision=jax.lax.Precision.HIGHEST) + b
        return jnp.maximum(h, 0.0)

    h_i, h_2 = lin(output_i), lin(x2d)
    mm = lax.dot_general(h_i.astype(matmul_dtype), h_2.astype(matmul_dtype),
                         dimension_numbers=(((1,), (1,)), ((), ())),
                         preferred_element_type=jnp.float32,
                         precision=jax.lax.Precision.HIGHEST)
    row_max = jnp.max(mm, axis=1, keepdims=True)
    shifted = mm - row_max
    return shifted - jnp.log(jnp.sum(jnp.exp(shifted), axis=1, keepdims=True))


if __name__ == "__main__":
    key = jax.random.PRNGKey(0)
    k1, k2, k3, k4 = jax.random.split(key, 4)

    # small, module-consistent shapes: output_i [2, 500], output_2d [8, 500]
    output_i = jax.random.normal(k1, (2, HIDDEN), dtype=jnp.float32)
    output_2d = jax.random.normal(k2, (8, HIDDEN), dtype=jnp.float32)
    index = 5  # -> P = 6 rows used from output_2d

    # deterministic Linear(500, 500) params, stored pre-transposed as W[in, out]
    # (uniform ~ +-1/sqrt(500), like the torch default init)
    bound = 1.0 / jnp.sqrt(jnp.float32(HIDDEN))
    w = jax.random.uniform(k3, (HIDDEN, HIDDEN), jnp.float32, -bound, bound)
    b = jax.random.uniform(k4, (1, HIDDEN), jnp.float32, -bound, bound)

    # one-time parameter prep (would be cached on the module in real use)
    w_p, b_p = prepare_params(w, b)

    prob = remote_model(output_i, output_2d, index, w_p, b_p)
    jax.block_until_ready(prob)

    assert prob.shape == (2, index + 1)
    # rows of log_softmax must exp-sum to 1
    assert bool(jnp.allclose(jnp.sum(jnp.exp(prob), axis=1), 1.0, atol=1e-4))
    # tight check vs a pure-JAX reference with the kernel's exact numerics
    # (bf16 MXU operands, f32 accumulation / f32 epilogue)
    matched = _reference(output_i, output_2d, index, w, b, jnp.bfloat16)
    assert bool(jnp.allclose(prob, matched, atol=2e-3, rtol=2e-3))
    # explicit parity bound vs exact-f32 PyTorch semantics (bf16-weight
    # quantization error; use prepare_params(..., weight_dtype=jnp.float32)
    # if exact f32 parity is required)
    exact = _reference(output_i, output_2d, index, w, b, jnp.float32)
    assert bool(jnp.allclose(prob, exact, atol=2.5e-1))
    print("KERNEL_OK")
</pallas_src>

<mosaic_0001>
module attributes {stable_mosaic.version = 11 : i64} {
  func.func @remote_model_kernel(%arg0: memref<8x500xf32, #tpu.memory_space<vmem>>, %arg1: memref<2x500xf32, #tpu.memory_space<vmem>>, %arg2: memref<512x512xbf16, #tpu.memory_space<vmem>>, %arg3: memref<1x512xf32, #tpu.memory_space<vmem>>, %arg4: memref<2x6xf32, #tpu.memory_space<vmem>>, %arg5: memref<16x512xf32, #tpu.memory_space<vmem>>) attributes {dimension_semantics = [], scalar_prefetch = 0 : i64, scratch_operands = 1 : i64, tpu.core_type = #tpu.core_type<tc>} {
    %cst = arith.constant 0.000000e+00 : f32
    %0 = vector.broadcast %cst : f32 to vector<16x512xf32>
    %c0 = arith.constant 0 : index
    %c0_0 = arith.constant 0 : index
    %1 = vector.load %arg5[%c0, %c0_0] : memref<16x512xf32, #tpu.memory_space<vmem>>, vector<16x512xf32>
    tpu.vector_store %arg5[%c0, %c0_0], %0 {strides = array<i32>} : memref<16x512xf32, #tpu.memory_space<vmem>>, vector<16x512xf32>,
    %c0_1 = arith.constant 0 : index
    %c0_2 = arith.constant 0 : index
    %2 = vector.load %arg0[%c0_1, %c0_2] : memref<8x500xf32, #tpu.memory_space<vmem>>, vector<8x500xf32>
    %c0_3 = arith.constant 0 : index
    %c0_4 = arith.constant 0 : index
    %3 = vector.load %arg5[%c0_3, %c0_4] : memref<16x512xf32, #tpu.memory_space<vmem>>, vector<8x500xf32>
    tpu.vector_store %arg5[%c0_3, %c0_4], %2 {strides = array<i32>} : memref<16x512xf32, #tpu.memory_space<vmem>>, vector<8x500xf32>,
    %c0_5 = arith.constant 0 : index
    %c0_6 = arith.constant 0 : index
    %4 = vector.load %arg1[%c0_5, %c0_6] : memref<2x500xf32, #tpu.memory_space<vmem>>, vector<2x500xf32>
    %c8 = arith.constant 8 : index
    %c0_7 = arith.constant 0 : index
    %5 = vector.load %arg5[%c8, %c0_7] : memref<16x512xf32, #tpu.memory_space<vmem>>, vector<2x500xf32>
    tpu.vector_store %arg5[%c8, %c0_7], %4 {strides = array<i32>} : memref<16x512xf32, #tpu.memory_space<vmem>>, vector<2x500xf32>,
    %c0_8 = arith.constant 0 : index
    %c0_9 = arith.constant 0 : index
    %6 = vector.load %arg5[%c0_8, %c0_9] : memref<16x512xf32, #tpu.memory_space<vmem>>, vector<16x512xf32>
    %7 = arith.truncf %6 : vector<16x512xf32> to vector<16x512xbf16>
    %c0_10 = arith.constant 0 : index
    %c0_11 = arith.constant 0 : index
    %8 = vector.load %arg2[%c0_10, %c0_11] : memref<512x512xbf16, #tpu.memory_space<vmem>>, vector<512x512xbf16>
    %cst_12 = arith.constant dense<0.000000e+00> : vector<16x512xf32>
    %9 = tpu.matmul %7, %8, %cst_12 {dimension_numbers = #tpu.dot_dimension_numbers<[1], [0], [0], [1], [0, 0, 1, 1], [], []>} : vector<16x512xbf16>, vector<512x512xbf16>, vector<16x512xf32> -> vector<16x512xf32>
    %c0_13 = arith.constant 0 : index
    %c0_14 = arith.constant 0 : index
    %10 = vector.load %arg3[%c0_13, %c0_14] : memref<1x512xf32, #tpu.memory_space<vmem>>, vector<1x512xf32>
    %11 = vector.broadcast %10 : vector<1x512xf32> to vector<16x512xf32>
    %12 = arith.addf %9, %11 : vector<16x512xf32>
    %cst_15 = arith.constant 0.000000e+00 : f32
    %13 = vector.broadcast %cst_15 : f32 to vector<16x512xf32>
    %14 = arith.maximumf %12, %13 : vector<16x512xf32>
    %15 = arith.truncf %14 : vector<16x512xf32> to vector<16x512xbf16>
    %cst_16 = arith.constant dense<0.000000e+00> : vector<16x16xf32>
    %16 = tpu.matmul %15, %15, %cst_16 {dimension_numbers = #tpu.dot_dimension_numbers<[1], [1], [0], [0], [0, 0, 1, 0], [], []>} : vector<16x512xbf16>, vector<16x512xbf16>, vector<16x16xf32> -> vector<16x16xf32>
    %17 = vector.extract_strided_slice %16 {offsets = [8, 0], sizes = [2, 6], strides = [1, 1]} : vector<16x16xf32> to vector<2x6xf32>
    %cst_17 = arith.constant dense<0xFF800000> : vector<2xf32>
    %18 = vector.multi_reduction <maximumf>, %17, %cst_17 [1] : vector<2x6xf32> to vector<2xf32>
    %19 = vector.shape_cast %18 : vector<2xf32> to vector<2x1xf32>
    %20 = vector.broadcast %19 : vector<2x1xf32> to vector<2x6xf32>
    %21 = arith.subf %17, %20 : vector<2x6xf32>
    %22 = math.exp %21 : vector<2x6xf32>
    %cst_18 = arith.constant dense<0.000000e+00> : vector<2xf32>
    %23 = vector.multi_reduction <add>, %22, %cst_18 [1] : vector<2x6xf32> to vector<2xf32>
    %24 = vector.shape_cast %23 : vector<2xf32> to vector<2x1xf32>
    %25 = math.log %24 : vector<2x1xf32>
    %26 = vector.broadcast %25 : vector<2x1xf32> to vector<2x6xf32>
    %27 = arith.subf %21, %26 : vector<2x6xf32>
    %c0_19 = arith.constant 0 : index
    %c0_20 = arith.constant 0 : index
    %28 = vector.load %arg4[%c0_19, %c0_20] : memref<2x6xf32, #tpu.memory_space<vmem>>, vector<2x6xf32>
    tpu.vector_store %arg4[%c0_19, %c0_20], %27 {strides = array<i32>} : memref<2x6xf32, #tpu.memory_space<vmem>>, vector<2x6xf32>,
    return
  }
}

</mosaic_0001>

<llo_original>
// kernel: tpu_custom_call.1
$region0: #{tpu_custom_call.1}
  #allocation0 [shape = 'u32[]', space=smem, size = 0x4, offset = 0x4, fixed_abs, tag = 'smem constant byte address 0x4 - core index']
  #allocation1 [shape = 'u32[144,128]{1,0:T(1,128)}', space=vmem, size = 0x12000, scoped, tag = 'internal scratch']
  #allocation2 [shape = 'f32[16,512]{1,0:T(8,128)}', space=vmem, size = 0x8000, scoped, tag = 'scratch operand']
  %s0 = inlined_call_operand.hbm [shape: f32[8,500], index: 0, kind: input, shape index: {}]
  %s1 = inlined_call_operand.hbm [shape: f32[2,500], index: 1, kind: input, shape index: {}]
  %s2 = inlined_call_operand.hbm [shape: bf16[512,512], index: 2, kind: input, shape index: {}]
  %s3 = inlined_call_operand.vmem [shape: f32[1,512], index: 3, kind: input, shape index: {}]
  %s4 = inlined_call_operand.hbm [shape: f32[2,6], index: 4, kind: output, shape index: {}]
  %s5 = sld [smem:[#allocation0]]
  $region38: #{tpu_custom_call.1} parent=0
    _
  %s7 = ssub.s32 1, %s5
  %s8 = scalar_select 0, %s7, %s5
  $region1: #{tpu_custom_call.1} parent=0
    #allocation3 [shape = 'u8[16384]{0}', space=vmem, size = 0x4000, scoped, tag = 'input window, operand 0, single buffered']
    #allocation4 [shape = 's32[1]{0}', space=sflag, size = 0x4, scoped, tag = 'scoped memory for tpu_custom_call.1']
    #allocation5 [shape = 's32[1]{0}', space=sflag, size = 0x4, scoped, tag = 'scoped memory for tpu_custom_call.1']
    #allocation6 [shape = 'u8[4096]{0}', space=vmem, size = 0x1000, scoped, tag = 'input window, operand 1, single buffered']
    #allocation7 [shape = 's32[1]{0}', space=sflag, size = 0x4, scoped, tag = 'scoped memory for tpu_custom_call.1']
    #allocation8 [shape = 'u8[524288]{0}', space=vmem, size = 0x80000, scoped, tag = 'input window, operand 2, single buffered']
    #allocation9 [shape = 'u8[1024]{0}', space=vmem, size = 0x400, scoped, tag = 'output window, operand 0, single buffered']
    %9 = vsyncpa [#allocation4], 0
    %10 = vsyncpa [#allocation7], 0
    %11 = vsyncpa [#allocation5], 0
    // Predicated region
    $region2: #{tpu_custom_call.1} parent=1 // pred_check
      _
    $region3: #{tpu_custom_call.1} parent=1 // pred_check_branch
      %13 = sbr.rel (0) target = $region5
    $region4: #{tpu_custom_call.1} parent=1 // pred_region
      %s15 = ssub.s32 512, 512
      %16 = vsyncadd [#allocation4], %s15
      %s18 = sshll.u32 [#allocation3], 4
      %s19 = int_to_ptr.vmem [resolvable:$true] %s18
      %21 = dma.hbm_to_vmem [thread:$0]  %s0, 512, %s19, [#allocation4]
    $region5: #{tpu_custom_call.1} parent=1 // pred_fallthru
      _
    // Predicated region
    $region6: #{tpu_custom_call.1} parent=1 // pred_check
      _
    $region7: #{tpu_custom_call.1} parent=1 // pred_check_branch
      %23 = sbr.rel (0) target = $region9
    $region8: #{tpu_custom_call.1} parent=1 // pred_region
      %s25 = ssub.s32 128, 128
      %26 = vsyncadd [#allocation7], %s25
      %s28 = sshll.u32 [#allocation6], 4
      %s29 = int_to_ptr.vmem [resolvable:$true] %s28
      %31 = dma.hbm_to_vmem [thread:$0]  %s1, 128, %s29, [#allocation7]
    $region9: #{tpu_custom_call.1} parent=1 // pred_fallthru
      _
    // Predicated region
    $region10: #{tpu_custom_call.1} parent=1 // pred_check
      _
    $region11: #{tpu_custom_call.1} parent=1 // pred_check_branch
      %33 = sbr.rel (0) target = $region13
    $region12: #{tpu_custom_call.1} parent=1 // pred_region
      %s35 = ssub.s32 16384, 16384
      %36 = vsyncadd [#allocation7], %s35
      %s37 = sshll.u32 [#allocation8], 4
      %s38 = int_to_ptr.vmem [resolvable:$true] %s37
      %43 = dma.hbm_to_vmem [thread:$0]  %s2, 16384, %s38, [#allocation7], 256, 256, 16
    $region13: #{tpu_custom_call.1} parent=1 // pred_fallthru
      _
    // Predicated region
    $region14: #{tpu_custom_call.1} parent=1 // pred_check
      _
    $region15: #{tpu_custom_call.1} parent=1 // pred_check_branch
      %45 = sbr.rel (0) target = $region17
    $region16: #{tpu_custom_call.1} parent=1 // pred_region
      _
    $region17: #{tpu_custom_call.1} parent=1 // pred_fallthru
      _
    // Predicated region
    $region18: #{tpu_custom_call.1} parent=1 // pred_check
      _
    $region19: #{tpu_custom_call.1} parent=1 // pred_check_branch
      %47 = sbr.rel (0) target = $region21
    $region20: #{tpu_custom_call.1} parent=1 // pred_region
      %48 = dma.done [#allocation4], 512
    $region21: #{tpu_custom_call.1} parent=1 // pred_fallthru
      _
    // Predicated region
    $region22: #{tpu_custom_call.1} parent=1 // pred_check
      _
    $region23: #{tpu_custom_call.1} parent=1 // pred_check_branch
      %50 = sbr.rel (0) target = $region25
    $region24: #{tpu_custom_call.1} parent=1 // pred_region
      %51 = dma.done [#allocation7], 128
    $region25: #{tpu_custom_call.1} parent=1 // pred_fallthru
      _
    // Predicated region
    $region26: #{tpu_custom_call.1} parent=1 // pred_check
      _
    $region27: #{tpu_custom_call.1} parent=1 // pred_check_branch
      %53 = sbr.rel (0) target = $region29
    $region28: #{tpu_custom_call.1} parent=1 // pred_region
      %54 = dma.done [#allocation7], 16384
    $region29: #{tpu_custom_call.1} parent=1 // pred_fallthru
      _
    %56 = vst [vmem:[#allocation2] sm:$0xff] 0.0
    %57 = vst [vmem:[#allocation2 + $0x8] sm:$0xff] 0.0
    %58 = vst [vmem:[#allocation2 + $0x10] sm:$0xff] 0.0
    %59 = vst [vmem:[#allocation2 + $0x18] sm:$0xff] 0.0
    %60 = vst [vmem:[#allocation2 + $0x20] sm:$0xff] 0.0
    %61 = vst [vmem:[#allocation2 + $0x28] sm:$0xff] 0.0
    %62 = vst [vmem:[#allocation2 + $0x30] sm:$0xff] 0.0
    %63 = vst [vmem:[#allocation2 + $0x38] sm:$0xff] 0.0
    %v64 = vld [vmem:[#allocation3] sm:$0xff]
    %v65 = vld [vmem:[#allocation3 + $0x8] sm:$0xff]
    %v66 = vld [vmem:[#allocation3 + $0x10] sm:$0xff]
    %v67 = vld [vmem:[#allocation3 + $0x18] sm:$0xff]
    %68 = vst [vmem:[#allocation2] sm:$0xff] %v64
    %69 = vst [vmem:[#allocation2 + $0x8] sm:$0xff] %v65
    %70 = vst [vmem:[#allocation2 + $0x10] sm:$0xff] %v66
    %vm71 = vcmask 949248
    %72 = vst.msk [vmem:[#allocation2 + $0x18] sm:$0xff] %vm71, %v67
    %v73 = vld [vmem:[#allocation6] sm:$0xff]
    %v75 = vcombine.high %v73, %v73
    %v77 = vunpack.c.l.s4 1983009808
    %v78 = vunpack.c.0.s8 %v77
    %v79 = vlaneseq
    %v80 = vshrl.u32 %v79, 7
    %v81 = vsub.s32 %v78, %v80
    %v82 = vrot.slane %v73, %v81
    %v84 = vunpack.c.l.s4 1983009808
    %v85 = vunpack.c.0.s8 %v84
    %v86 = vlaneseq
    %v87 = vshrl.u32 %v86, 7
    %v88 = vsub.s32 %v85, %v87
    %v89 = vrot.slane %v75, %v88
    %v90 = vcombine.high %v82, %v82
    %v91 = vcombine.high %v89, %v89
    %96 = vst [vmem:[#allocation2 + $0x20] sm:$0x3] %v82
    %97 = vst [vmem:[#allocation2 + $0x28] sm:$0x3] %v90
    %98 = vst [vmem:[#allocation2 + $0x30] sm:$0x3] %v89
    %vm99 = vcmask 943104
    %100 = vst.msk [vmem:[#allocation2 + $0x38] sm:$0x3] %vm99, %v91
    %v101 = vld [vmem:[#allocation2] sm:$0xff]
    %v102 = vld [vmem:[#allocation2 + $0x8] sm:$0xff]
    %v103 = vld [vmem:[#allocation2 + $0x10] sm:$0xff]
    %v104 = vld [vmem:[#allocation2 + $0x18] sm:$0xff]
    %v105 = vld [vmem:[#allocation2 + $0x20] sm:$0xff]
    %v106 = vld [vmem:[#allocation2 + $0x28] sm:$0xff]
    %v107 = vld [vmem:[#allocation2 + $0x30] sm:$0xff]
    %v108 = vld [vmem:[#allocation2 + $0x38] sm:$0xff]
    %v109 = vpack.c.bf16 %v105, %v101
    %v110 = vpack.c.bf16 %v106, %v102
    %v111 = vpack.c.bf16 %v107, %v103
    %v112 = vpack.c.bf16 %v108, %v104
    %v113 = vld [vmem:[#allocation8] sm:$0xff]
    %v114 = vld [vmem:[#allocation8 + $0x8] sm:$0xff]
    %v115 = vld [vmem:[#allocation8 + $0x10] sm:$0xff]
    %v116 = vld [vmem:[#allocation8 + $0x18] sm:$0xff]
    %v117 = vld [vmem:[#allocation8 + $0x20] sm:$0xff]
    %v118 = vld [vmem:[#allocation8 + $0x28] sm:$0xff]
    %v119 = vld [vmem:[#allocation8 + $0x30] sm:$0xff]
    %v120 = vld [vmem:[#allocation8 + $0x38] sm:$0xff]
    %v121 = vld [vmem:[#allocation8 + $0x40] sm:$0xff]
    %v122 = vld [vmem:[#allocation8 + $0x48] sm:$0xff]
    %v123 = vld [vmem:[#allocation8 + $0x50] sm:$0xff]
    %v124 = vld [vmem:[#allocation8 + $0x58] sm:$0xff]
    %v125 = vld [vmem:[#allocation8 + $0x60] sm:$0xff]
    %v126 = vld [vmem:[#allocation8 + $0x68] sm:$0xff]
    %v127 = vld [vmem:[#allocation8 + $0x70] sm:$0xff]
    %v128 = vld [vmem:[#allocation8 + $0x78] sm:$0xff]
    %v129 = vld [vmem:[#allocation8 + $0x80] sm:$0xff]
    %v130 = vld [vmem:[#allocation8 + $0x88] sm:$0xff]
    %v131 = vld [vmem:[#allocation8 + $0x90] sm:$0xff]
    %v132 = vld [vmem:[#allocation8 + $0x98] sm:$0xff]
    %v133 = vld [vmem:[#allocation8 + $0xa0] sm:$0xff]
    %v134 = vld [vmem:[#allocation8 + $0xa8] sm:$0xff]
    %v135 = vld [vmem:[#allocation8 + $0xb0] sm:$0xff]
    %v136 = vld [vmem:[#allocation8 + $0xb8] sm:$0xff]
    %v137 = vld [vmem:[#allocation8 + $0xc0] sm:$0xff]
    %v138 = vld [vmem:[#allocation8 + $0xc8] sm:$0xff]
    %v139 = vld [vmem:[#allocation8 + $0xd0] sm:$0xff]
    %v140 = vld [vmem:[#allocation8 + $0xd8] sm:$0xff]
    %v141 = vld [vmem:[#allocation8 + $0xe0] sm:$0xff]
    %v142 = vld [vmem:[#allocation8 + $0xe8] sm:$0xff]
    %v143 = vld [vmem:[#allocation8 + $0xf0] sm:$0xff]
    %v144 = vld [vmem:[#allocation8 + $0xf8] sm:$0xff]
    %v145 = vld [vmem:[#allocation8 + $0x100] sm:$0xff]
    %v146 = vld [vmem:[#allocation8 + $0x108] sm:$0xff]
    %v147 = vld [vmem:[#allocation8 + $0x110] sm:$0xff]
    %v148 = vld [vmem:[#allocation8 + $0x118] sm:$0xff]
    %v149 = vld [vmem:[#allocation8 + $0x120] sm:$0xff]
    %v150 = vld [vmem:[#allocation8 + $0x128] sm:$0xff]
    %v151 = vld [vmem:[#allocation8 + $0x130] sm:$0xff]
    %v152 = vld [vmem:[#allocation8 + $0x138] sm:$0xff]
    %v153 = vld [vmem:[#allocation8 + $0x140] sm:$0xff]
    %v154 = vld [vmem:[#allocation8 + $0x148] sm:$0xff]
    %v155 = vld [vmem:[#allocation8 + $0x150] sm:$0xff]
    %v156 = vld [vmem:[#allocation8 + $0x158] sm:$0xff]
    %v157 = vld [vmem:[#allocation8 + $0x160] sm:$0xff]
    %v158 = vld [vmem:[#allocation8 + $0x168] sm:$0xff]
    %v159 = vld [vmem:[#allocation8 + $0x170] sm:$0xff]
    %v160 = vld [vmem:[#allocation8 + $0x178] sm:$0xff]
    %v161 = vld [vmem:[#allocation8 + $0x180] sm:$0xff]
    %v162 = vld [vmem:[#allocation8 + $0x188] sm:$0xff]
    %v163 = vld [vmem:[#allocation8 + $0x190] sm:$0xff]
    %v164 = vld [vmem:[#allocation8 + $0x198] sm:$0xff]
    %v165 = vld [vmem:[#allocation8 + $0x1a0] sm:$0xff]
    %v166 = vld [vmem:[#allocation8 + $0x1a8] sm:$0xff]
    %v167 = vld [vmem:[#allocation8 + $0x1b0] sm:$0xff]
    %v168 = vld [vmem:[#allocation8 + $0x1b8] sm:$0xff]
    %v169 = vld [vmem:[#allocation8 + $0x1c0] sm:$0xff]
    %v170 = vld [vmem:[#allocation8 + $0x1c8] sm:$0xff]
    %v171 = vld [vmem:[#allocation8 + $0x1d0] sm:$0xff]
    %v172 = vld [vmem:[#allocation8 + $0x1d8] sm:$0xff]
    %v173 = vld [vmem:[#allocation8 + $0x1e0] sm:$0xff]
    %v174 = vld [vmem:[#allocation8 + $0x1e8] sm:$0xff]
    %v175 = vld [vmem:[#allocation8 + $0x1f0] sm:$0xff]
    %v176 = vld [vmem:[#allocation8 + $0x1f8] sm:$0xff]
    %v177 = vld [vmem:[#allocation8 + $0x200] sm:$0xff]
    %v178 = vld [vmem:[#allocation8 + $0x208] sm:$0xff]
    %v179 = vld [vmem:[#allocation8 + $0x210] sm:$0xff]
    %v180 = vld [vmem:[#allocation8 + $0x218] sm:$0xff]
    %v181 = vld [vmem:[#allocation8 + $0x220] sm:$0xff]
    %v182 = vld [vmem:[#allocation8 + $0x228] sm:$0xff]
    %v183 = vld [vmem:[#allocation8 + $0x230] sm:$0xff]
    %v184 = vld [vmem:[#allocation8 + $0x238] sm:$0xff]
    %v185 = vld [vmem:[#allocation8 + $0x240] sm:$0xff]
    %v186 = vld [vmem:[#allocation8 + $0x248] sm:$0xff]
    %v187 = vld [vmem:[#allocation8 + $0x250] sm:$0xff]
    %v188 = vld [vmem:[#allocation8 + $0x258] sm:$0xff]
    %v189 = vld [vmem:[#allocation8 + $0x260] sm:$0xff]
    %v190 = vld [vmem:[#allocation8 + $0x268] sm:$0xff]
    %v191 = vld [vmem:[#allocation8 + $0x270] sm:$0xff]
    %v192 = vld [vmem:[#allocation8 + $0x278] sm:$0xff]
    %v193 = vld [vmem:[#allocation8 + $0x280] sm:$0xff]
    %v194 = vld [vmem:[#allocation8 + $0x288] sm:$0xff]
    %v195 = vld [vmem:[#allocation8 + $0x290] sm:$0xff]
    %v196 = vld [vmem:[#allocation8 + $0x298] sm:$0xff]
    %v197 = vld [vmem:[#allocation8 + $0x2a0] sm:$0xff]
    %v198 = vld [vmem:[#allocation8 + $0x2a8] sm:$0xff]
    %v199 = vld [vmem:[#allocation8 + $0x2b0] sm:$0xff]
    %v200 = vld [vmem:[#allocation8 + $0x2b8] sm:$0xff]
    %v201 = vld [vmem:[#allocation8 + $0x2c0] sm:$0xff]
    %v202 = vld [vmem:[#allocation8 + $0x2c8] sm:$0xff]
    %v203 = vld [vmem:[#allocation8 + $0x2d0] sm:$0xff]
    %v204 = vld [vmem:[#allocation8 + $0x2d8] sm:$0xff]
    %v205 = vld [vmem:[#allocation8 + $0x2e0] sm:$0xff]
    %v206 = vld [vmem:[#allocation8 + $0x2e8] sm:$0xff]
    %v207 = vld [vmem:[#allocation8 + $0x2f0] sm:$0xff]
    %v208 = vld [vmem:[#allocation8 + $0x2f8] sm:$0xff]
    %v209 = vld [vmem:[#allocation8 + $0x300] sm:$0xff]
    %v210 = vld [vmem:[#allocation8 + $0x308] sm:$0xff]
    %v211 = vld [vmem:[#allocation8 + $0x310] sm:$0xff]
    %v212 = vld [vmem:[#allocation8 + $0x318] sm:$0xff]
    %v213 = vld [vmem:[#allocation8 + $0x320] sm:$0xff]
    %v214 = vld [vmem:[#allocation8 + $0x328] sm:$0xff]
    %v215 = vld [vmem:[#allocation8 + $0x330] sm:$0xff]
    %v216 = vld [vmem:[#allocation8 + $0x338] sm:$0xff]
    %v217 = vld [vmem:[#allocation8 + $0x340] sm:$0xff]
    %v218 = vld [vmem:[#allocation8 + $0x348] sm:$0xff]
    %v219 = vld [vmem:[#allocation8 + $0x350] sm:$0xff]
    %v220 = vld [vmem:[#allocation8 + $0x358] sm:$0xff]
    %v221 = vld [vmem:[#allocation8 + $0x360] sm:$0xff]
    %v222 = vld [vmem:[#allocation8 + $0x368] sm:$0xff]
    %v223 = vld [vmem:[#allocation8 + $0x370] sm:$0xff]
    %v224 = vld [vmem:[#allocation8 + $0x378] sm:$0xff]
    %v225 = vld [vmem:[#allocation8 + $0x380] sm:$0xff]
    %v226 = vld [vmem:[#allocation8 + $0x388] sm:$0xff]
    %v227 = vld [vmem:[#allocation8 + $0x390] sm:$0xff]
    %v228 = vld [vmem:[#allocation8 + $0x398] sm:$0xff]
    %v229 = vld [vmem:[#allocation8 + $0x3a0] sm:$0xff]
    %v230 = vld [vmem:[#allocation8 + $0x3a8] sm:$0xff]
    %v231 = vld [vmem:[#allocation8 + $0x3b0] sm:$0xff]
    %v232 = vld [vmem:[#allocation8 + $0x3b8] sm:$0xff]
    %v233 = vld [vmem:[#allocation8 + $0x3c0] sm:$0xff]
    %v234 = vld [vmem:[#allocation8 + $0x3c8] sm:$0xff]
    %v235 = vld [vmem:[#allocation8 + $0x3d0] sm:$0xff]
    %v236 = vld [vmem:[#allocation8 + $0x3d8] sm:$0xff]
    %v237 = vld [vmem:[#allocation8 + $0x3e0] sm:$0xff]
    %v238 = vld [vmem:[#allocation8 + $0x3e8] sm:$0xff]
    %v239 = vld [vmem:[#allocation8 + $0x3f0] sm:$0xff]
    %v240 = vld [vmem:[#allocation8 + $0x3f8] sm:$0xff]
    %v241 = vld [vmem:[%s3] sm:$0xf]
    %v243 = vlaneseq
    %v244 = vshrl.u32 %v243, 7
    %v245 = vsub.s32 0, %v244
    %v246 = vrot.slane %v241, %v245
    %v247 = vlaneseq
    %v248 = vshrl.u32 %v247, 7
    %v249 = vsub.s32 1, %v248
    %v250 = vrot.slane %v241, %v249
    %v251 = vlaneseq
    %v252 = vshrl.u32 %v251, 7
    %v253 = vsub.s32 2, %v252
    %v254 = vrot.slane %v241, %v253
    %v255 = vlaneseq
    %v256 = vshrl.u32 %v255, 7
    %v257 = vsub.s32 3, %v256
    %v258 = vrot.slane %v241, %v257
    %v391 = vunpack.c.l.b16 %v113
    %v392 = vunpack.c.h.b16 %v113
    %v393 = vunpack.c.l.b16 %v114
    %v394 = vunpack.c.h.b16 %v114
    %v395 = vunpack.c.l.b16 %v115
    %v396 = vunpack.c.h.b16 %v115
    %v397 = vunpack.c.l.b16 %v116
    %v398 = vunpack.c.h.b16 %v116
    %v399 = vunpack.c.l.b16 %v117
    %v400 = vunpack.c.h.b16 %v117
    %v401 = vunpack.c.l.b16 %v118
    %v402 = vunpack.c.h.b16 %v118
    %v403 = vunpack.c.l.b16 %v119
    %v404 = vunpack.c.h.b16 %v119
    %v405 = vunpack.c.l.b16 %v120
    %v406 = vunpack.c.h.b16 %v120
    %v407 = vunpack.c.l.b16 %v121
    %v408 = vunpack.c.h.b16 %v121
    %v409 = vunpack.c.l.b16 %v122
    %v410 = vunpack.c.h.b16 %v122
    %v411 = vunpack.c.l.b16 %v123
    %v412 = vunpack.c.h.b16 %v123
    %v413 = vunpack.c.l.b16 %v124
    %v414 = vunpack.c.h.b16 %v124
    %v415 = vunpack.c.l.b16 %v125
    %v416 = vunpack.c.h.b16 %v125
    %v417 = vunpack.c.l.b16 %v126
    %v418 = vunpack.c.h.b16 %v126
    %v419 = vunpack.c.l.b16 %v127
    %v420 = vunpack.c.h.b16 %v127
    %v421 = vunpack.c.l.b16 %v128
    %v422 = vunpack.c.h.b16 %v128
    %v423 = vunpack.c.l.b16 %v129
    %v424 = vunpack.c.h.b16 %v129
    %v425 = vunpack.c.l.b16 %v130
    %v426 = vunpack.c.h.b16 %v130
    %v427 = vunpack.c.l.b16 %v131
    %v428 = vunpack.c.h.b16 %v131
    %v429 = vunpack.c.l.b16 %v132
    %v430 = vunpack.c.h.b16 %v132
    %v431 = vunpack.c.l.b16 %v133
    %v432 = vunpack.c.h.b16 %v133
    %v433 = vunpack.c.l.b16 %v134
    %v434 = vunpack.c.h.b16 %v134
    %v435 = vunpack.c.l.b16 %v135
    %v436 = vunpack.c.h.b16 %v135
    %v437 = vunpack.c.l.b16 %v136
    %v438 = vunpack.c.h.b16 %v136
    %v439 = vunpack.c.l.b16 %v137
    %v440 = vunpack.c.h.b16 %v137
    %v441 = vunpack.c.l.b16 %v138
    %v442 = vunpack.c.h.b16 %v138
    %v443 = vunpack.c.l.b16 %v139
    %v444 = vunpack.c.h.b16 %v139
    %v445 = vunpack.c.l.b16 %v140
    %v446 = vunpack.c.h.b16 %v140
    %v447 = vunpack.c.l.b16 %v141
    %v448 = vunpack.c.h.b16 %v141
    %v449 = vunpack.c.l.b16 %v142
    %v450 = vunpack.c.h.b16 %v142
    %v451 = vunpack.c.l.b16 %v143
    %v452 = vunpack.c.h.b16 %v143
    %v453 = vunpack.c.l.b16 %v144
    %v454 = vunpack.c.h.b16 %v144
    %v455 = vunpack.c.l.b16 %v145
    %v456 = vunpack.c.h.b16 %v145
    %v457 = vunpack.c.l.b16 %v146
    %v458 = vunpack.c.h.b16 %v146
    %v459 = vunpack.c.l.b16 %v147
    %v460 = vunpack.c.h.b16 %v147
    %v461 = vunpack.c.l.b16 %v148
    %v462 = vunpack.c.h.b16 %v148
    %v463 = vunpack.c.l.b16 %v149
    %v464 = vunpack.c.h.b16 %v149
    %v465 = vunpack.c.l.b16 %v150
    %v466 = vunpack.c.h.b16 %v150
    %v467 = vunpack.c.l.b16 %v151
    %v468 = vunpack.c.h.b16 %v151
    %v469 = vunpack.c.l.b16 %v152
    %v470 = vunpack.c.h.b16 %v152
    %v471 = vunpack.c.l.b16 %v153
    %v472 = vunpack.c.h.b16 %v153
    %v473 = vunpack.c.l.b16 %v154
    %v474 = vunpack.c.h.b16 %v154
    %v475 = vunpack.c.l.b16 %v155
    %v476 = vunpack.c.h.b16 %v155
    %v477 = vunpack.c.l.b16 %v156
    %v478 = vunpack.c.h.b16 %v156
    %v479 = vunpack.c.l.b16 %v157
    %v480 = vunpack.c.h.b16 %v157
    %v481 = vunpack.c.l.b16 %v158
    %v482 = vunpack.c.h.b16 %v158
    %v483 = vunpack.c.l.b16 %v159
    %v484 = vunpack.c.h.b16 %v159
    %v485 = vunpack.c.l.b16 %v160
    %v486 = vunpack.c.h.b16 %v160
    %v487 = vunpack.c.l.b16 %v161
    %v488 = vunpack.c.h.b16 %v161
    %v489 = vunpack.c.l.b16 %v162
    %v490 = vunpack.c.h.b16 %v162
    %v491 = vunpack.c.l.b16 %v163
    %v492 = vunpack.c.h.b16 %v163
    %v493 = vunpack.c.l.b16 %v164
    %v494 = vunpack.c.h.b16 %v164
    %v495 = vunpack.c.l.b16 %v165
    %v496 = vunpack.c.h.b16 %v165
    %v497 = vunpack.c.l.b16 %v166
    %v498 = vunpack.c.h.b16 %v166
    %v499 = vunpack.c.l.b16 %v167
    %v500 = vunpack.c.h.b16 %v167
    %v501 = vunpack.c.l.b16 %v168
    %v502 = vunpack.c.h.b16 %v168
    %v503 = vunpack.c.l.b16 %v169
    %v504 = vunpack.c.h.b16 %v169
    %v505 = vunpack.c.l.b16 %v170
    %v506 = vunpack.c.h.b16 %v170
    %v507 = vunpack.c.l.b16 %v171
    %v508 = vunpack.c.h.b16 %v171
    %v509 = vunpack.c.l.b16 %v172
    %v510 = vunpack.c.h.b16 %v172
    %v511 = vunpack.c.l.b16 %v173
    %v512 = vunpack.c.h.b16 %v173
    %v513 = vunpack.c.l.b16 %v174
    %v514 = vunpack.c.h.b16 %v174
    %v515 = vunpack.c.l.b16 %v175
    %v516 = vunpack.c.h.b16 %v175
    %v517 = vunpack.c.l.b16 %v176
    %v518 = vunpack.c.h.b16 %v176
    %v519 = vunpack.c.l.b16 %v177
    %v520 = vunpack.c.h.b16 %v177
    %v521 = vunpack.c.l.b16 %v178
    %v522 = vunpack.c.h.b16 %v178
    %v523 = vunpack.c.l.b16 %v179
    %v524 = vunpack.c.h.b16 %v179
    %v525 = vunpack.c.l.b16 %v180
    %v526 = vunpack.c.h.b16 %v180
    %v527 = vunpack.c.l.b16 %v181
    %v528 = vunpack.c.h.b16 %v181
    %v529 = vunpack.c.l.b16 %v182
    %v530 = vunpack.c.h.b16 %v182
    %v531 = vunpack.c.l.b16 %v183
    %v532 = vunpack.c.h.b16 %v183
    %v533 = vunpack.c.l.b16 %v184
    %v534 = vunpack.c.h.b16 %v184
    %v535 = vunpack.c.l.b16 %v185
    %v536 = vunpack.c.h.b16 %v185
    %v537 = vunpack.c.l.b16 %v186
    %v538 = vunpack.c.h.b16 %v186
    %v539 = vunpack.c.l.b16 %v187
    %v540 = vunpack.c.h.b16 %v187
    %v541 = vunpack.c.l.b16 %v188
    %v542 = vunpack.c.h.b16 %v188
    %v543 = vunpack.c.l.b16 %v189
    %v544 = vunpack.c.h.b16 %v189
    %v545 = vunpack.c.l.b16 %v190
    %v546 = vunpack.c.h.b16 %v190
    %v547 = vunpack.c.l.b16 %v191
    %v548 = vunpack.c.h.b16 %v191
    %v549 = vunpack.c.l.b16 %v192
    %v550 = vunpack.c.h.b16 %v192
    %v551 = vunpack.c.l.b16 %v193
    %v552 = vunpack.c.h.b16 %v193
    %v553 = vunpack.c.l.b16 %v194
    %v554 = vunpack.c.h.b16 %v194
    %v555 = vunpack.c.l.b16 %v195
    %v556 = vunpack.c.h.b16 %v195
    %v557 = vunpack.c.l.b16 %v196
    %v558 = vunpack.c.h.b16 %v196
    %v559 = vunpack.c.l.b16 %v197
    %v560 = vunpack.c.h.b16 %v197
    %v561 = vunpack.c.l.b16 %v198
    %v562 = vunpack.c.h.b16 %v198
    %v563 = vunpack.c.l.b16 %v199
    %v564 = vunpack.c.h.b16 %v199
    %v565 = vunpack.c.l.b16 %v200
    %v566 = vunpack.c.h.b16 %v200
    %v567 = vunpack.c.l.b16 %v201
    %v568 = vunpack.c.h.b16 %v201
    %v569 = vunpack.c.l.b16 %v202
    %v570 = vunpack.c.h.b16 %v202
    %v571 = vunpack.c.l.b16 %v203
    %v572 = vunpack.c.h.b16 %v203
    %v573 = vunpack.c.l.b16 %v204
    %v574 = vunpack.c.h.b16 %v204
    %v575 = vunpack.c.l.b16 %v205
    %v576 = vunpack.c.h.b16 %v205
    %v577 = vunpack.c.l.b16 %v206
    %v578 = vunpack.c.h.b16 %v206
    %v579 = vunpack.c.l.b16 %v207
    %v580 = vunpack.c.h.b16 %v207
    %v581 = vunpack.c.l.b16 %v208
    %v582 = vunpack.c.h.b16 %v208
    %v583 = vunpack.c.l.b16 %v209
    %v584 = vunpack.c.h.b16 %v209
    %v585 = vunpack.c.l.b16 %v210
    %v586 = vunpack.c.h.b16 %v210
    %v587 = vunpack.c.l.b16 %v211
    %v588 = vunpack.c.h.b16 %v211
    %v589 = vunpack.c.l.b16 %v212
    %v590 = vunpack.c.h.b16 %v212
    %v591 = vunpack.c.l.b16 %v213
    %v592 = vunpack.c.h.b16 %v213
    %v593 = vunpack.c.l.b16 %v214
    %v594 = vunpack.c.h.b16 %v214
    %v595 = vunpack.c.l.b16 %v215
    %v596 = vunpack.c.h.b16 %v215
    %v597 = vunpack.c.l.b16 %v216
    %v598 = vunpack.c.h.b16 %v216
    %v599 = vunpack.c.l.b16 %v217
    %v600 = vunpack.c.h.b16 %v217
    %v601 = vunpack.c.l.b16 %v218
    %v602 = vunpack.c.h.b16 %v218
    %v603 = vunpack.c.l.b16 %v219
    %v604 = vunpack.c.h.b16 %v219
    %v605 = vunpack.c.l.b16 %v220
    %v606 = vunpack.c.h.b16 %v220
    %v607 = vunpack.c.l.b16 %v221
    %v608 = vunpack.c.h.b16 %v221
    %v609 = vunpack.c.l.b16 %v222
    %v610 = vunpack.c.h.b16 %v222
    %v611 = vunpack.c.l.b16 %v223
    %v612 = vunpack.c.h.b16 %v223
    %v613 = vunpack.c.l.b16 %v224
    %v614 = vunpack.c.h.b16 %v224
    %v615 = vunpack.c.l.b16 %v225
    %v616 = vunpack.c.h.b16 %v225
    %v617 = vunpack.c.l.b16 %v226
    %v618 = vunpack.c.h.b16 %v226
    %v619 = vunpack.c.l.b16 %v227
    %v620 = vunpack.c.h.b16 %v227
    %v621 = vunpack.c.l.b16 %v228
    %v622 = vunpack.c.h.b16 %v228
    %v623 = vunpack.c.l.b16 %v229
    %v624 = vunpack.c.h.b16 %v229
    %v625 = vunpack.c.l.b16 %v230
    %v626 = vunpack.c.h.b16 %v230
    %v627 = vunpack.c.l.b16 %v231
    %v628 = vunpack.c.h.b16 %v231
    %v629 = vunpack.c.l.b16 %v232
    %v630 = vunpack.c.h.b16 %v232
    %v631 = vunpack.c.l.b16 %v233
    %v632 = vunpack.c.h.b16 %v233
    %v633 = vunpack.c.l.b16 %v234
    %v634 = vunpack.c.h.b16 %v234
    %v635 = vunpack.c.l.b16 %v235
    %v636 = vunpack.c.h.b16 %v235
    %v637 = vunpack.c.l.b16 %v236
    %v638 = vunpack.c.h.b16 %v236
    %v639 = vunpack.c.l.b16 %v237
    %v640 = vunpack.c.h.b16 %v237
    %v641 = vunpack.c.l.b16 %v238
    %v642 = vunpack.c.h.b16 %v238
    %v643 = vunpack.c.l.b16 %v239
    %v644 = vunpack.c.h.b16 %v239
    %v645 = vunpack.c.l.b16 %v240
    %v646 = vunpack.c.h.b16 %v240
    %v647 = vpack.c.b16 %v395, %v391
    %v648 = vpack.c.b16 %v396, %v392
    %v649 = vpack.c.b16 %v397, %v393
    %v650 = vpack.c.b16 %v398, %v394
    %v651 = vpack.c.b16 %v403, %v399
    %v652 = vpack.c.b16 %v404, %v400
    %v653 = vpack.c.b16 %v405, %v401
    %v654 = vpack.c.b16 %v406, %v402
    %v655 = vpack.c.b16 %v411, %v407
    %v656 = vpack.c.b16 %v412, %v408
    %v657 = vpack.c.b16 %v413, %v409
    %v658 = vpack.c.b16 %v414, %v410
    %v659 = vpack.c.b16 %v419, %v415
    %v660 = vpack.c.b16 %v420, %v416
    %v661 = vpack.c.b16 %v421, %v417
    %v662 = vpack.c.b16 %v422, %v418
    %v663 = vpack.c.b16 %v427, %v423
    %v664 = vpack.c.b16 %v428, %v424
    %v665 = vpack.c.b16 %v429, %v425
    %v666 = vpack.c.b16 %v430, %v426
    %v667 = vpack.c.b16 %v435, %v431
    %v668 = vpack.c.b16 %v436, %v432
    %v669 = vpack.c.b16 %v437, %v433
    %v670 = vpack.c.b16 %v438, %v434
    %v671 = vpack.c.b16 %v443, %v439
    %v672 = vpack.c.b16 %v444, %v440
    %v673 = vpack.c.b16 %v445, %v441
    %v674 = vpack.c.b16 %v446, %v442
    %v675 = vpack.c.b16 %v451, %v447
    %v676 = vpack.c.b16 %v452, %v448
    %v677 = vpack.c.b16 %v453, %v449
    %v678 = vpack.c.b16 %v454, %v450
    %v679 = vpack.c.b16 %v459, %v455
    %v680 = vpack.c.b16 %v460, %v456
    %v681 = vpack.c.b16 %v461, %v457
    %v682 = vpack.c.b16 %v462, %v458
    %v683 = vpack.c.b16 %v467, %v463
    %v684 = vpack.c.b16 %v468, %v464
    %v685 = vpack.c.b16 %v469, %v465
    %v686 = vpack.c.b16 %v470, %v466
    %v687 = vpack.c.b16 %v475, %v471
    %v688 = vpack.c.b16 %v476, %v472
    %v689 = vpack.c.b16 %v477, %v473
    %v690 = vpack.c.b16 %v478, %v474
    %v691 = vpack.c.b16 %v483, %v479
    %v692 = vpack.c.b16 %v484, %v480
    %v693 = vpack.c.b16 %v485, %v481
    %v694 = vpack.c.b16 %v486, %v482
    %v695 = vpack.c.b16 %v491, %v487
    %v696 = vpack.c.b16 %v492, %v488
    %v697 = vpack.c.b16 %v493, %v489
    %v698 = vpack.c.b16 %v494, %v490
    %v699 = vpack.c.b16 %v499, %v495
    %v700 = vpack.c.b16 %v500, %v496
    %v701 = vpack.c.b16 %v501, %v497
    %v702 = vpack.c.b16 %v502, %v498
    %v703 = vpack.c.b16 %v507, %v503
    %v704 = vpack.c.b16 %v508, %v504
    %v705 = vpack.c.b16 %v509, %v505
    %v706 = vpack.c.b16 %v510, %v506
    %v707 = vpack.c.b16 %v515, %v511
    %v708 = vpack.c.b16 %v516, %v512
    %v709 = vpack.c.b16 %v517, %v513
    %v710 = vpack.c.b16 %v518, %v514
    %v711 = vpack.c.b16 %v523, %v519
    %v712 = vpack.c.b16 %v524, %v520
    %v713 = vpack.c.b16 %v525, %v521
    %v714 = vpack.c.b16 %v526, %v522
    %v715 = vpack.c.b16 %v531, %v527
    %v716 = vpack.c.b16 %v532, %v528
    %v717 = vpack.c.b16 %v533, %v529
    %v718 = vpack.c.b16 %v534, %v530
    %v719 = vpack.c.b16 %v539, %v535
    %v720 = vpack.c.b16 %v540, %v536
    %v721 = vpack.c.b16 %v541, %v537
    %v722 = vpack.c.b16 %v542, %v538
    %v723 = vpack.c.b16 %v547, %v543
    %v724 = vpack.c.b16 %v548, %v544
    %v725 = vpack.c.b16 %v549, %v545
    %v726 = vpack.c.b16 %v550, %v546
    %v727 = vpack.c.b16 %v555, %v551
    %v728 = vpack.c.b16 %v556, %v552
    %v729 = vpack.c.b16 %v557, %v553
    %v730 = vpack.c.b16 %v558, %v554
    %v731 = vpack.c.b16 %v563, %v559
    %v732 = vpack.c.b16 %v564, %v560
    %v733 = vpack.c.b16 %v565, %v561
    %v734 = vpack.c.b16 %v566, %v562
    %v735 = vpack.c.b16 %v571, %v567
    %v736 = vpack.c.b16 %v572, %v568
    %v737 = vpack.c.b16 %v573, %v569
    %v738 = vpack.c.b16 %v574, %v570
    %v739 = vpack.c.b16 %v579, %v575
    %v740 = vpack.c.b16 %v580, %v576
    %v741 = vpack.c.b16 %v581, %v577
    %v742 = vpack.c.b16 %v582, %v578
    %v743 = vpack.c.b16 %v587, %v583
    %v744 = vpack.c.b16 %v588, %v584
    %v745 = vpack.c.b16 %v589, %v585
    %v746 = vpack.c.b16 %v590, %v586
    %v747 = vpack.c.b16 %v595, %v591
    %v748 = vpack.c.b16 %v596, %v592
    %v749 = vpack.c.b16 %v597, %v593
    %v750 = vpack.c.b16 %v598, %v594
    %v751 = vpack.c.b16 %v603, %v599
    %v752 = vpack.c.b16 %v604, %v600
    %v753 = vpack.c.b16 %v605, %v601
    %v754 = vpack.c.b16 %v606, %v602
    %v755 = vpack.c.b16 %v611, %v607
    %v756 = vpack.c.b16 %v612, %v608
    %v757 = vpack.c.b16 %v613, %v609
    %v758 = vpack.c.b16 %v614, %v610
    %v759 = vpack.c.b16 %v619, %v615
    %v760 = vpack.c.b16 %v620, %v616
    %v761 = vpack.c.b16 %v621, %v617
    %v762 = vpack.c.b16 %v622, %v618
    %v763 = vpack.c.b16 %v627, %v623
    %v764 = vpack.c.b16 %v628, %v624
    %v765 = vpack.c.b16 %v629, %v625
    %v766 = vpack.c.b16 %v630, %v626
    %v767 = vpack.c.b16 %v635, %v631
    %v768 = vpack.c.b16 %v636, %v632
    %v769 = vpack.c.b16 %v637, %v633
    %v770 = vpack.c.b16 %v638, %v634
    %v771 = vpack.c.b16 %v643, %v639
    %v772 = vpack.c.b16 %v644, %v640
    %v773 = vpack.c.b16 %v645, %v641
    %v774 = vpack.c.b16 %v646, %v642
    %903 = vmatprep.subr.bf16.mxu0 %v648
    %904 = vmatpush1.bf16.msra.mxu0 %v647
    %905 = vmatprep.subr.bf16.mxu0 %v652
    %906 = vmatpush1.bf16.msra.mxu0 %v651
    %907 = vmatprep.subr.bf16.mxu0 %v656
    %908 = vmatpush1.bf16.msra.mxu0 %v655
    %909 = vmatprep.subr.bf16.mxu0 %v660
    %910 = vmatpush1.bf16.msra.mxu0 %v659
    %911 = vmatprep.subr.bf16.mxu0 %v664
    %912 = vmatpush1.bf16.msra.mxu0 %v663
    %913 = vmatprep.subr.bf16.mxu0 %v668
    %914 = vmatpush1.bf16.msra.mxu0 %v667
    %915 = vmatprep.subr.bf16.mxu0 %v672
    %916 = vmatpush1.bf16.msra.mxu0 %v671
    %917 = vmatprep.subr.bf16.mxu0 %v676
    %918 = vmatpush1.bf16.msra.mxu0 %v675
    %919 = vmatprep.subr.bf16.mxu0 %v680
    %920 = vmatpush1.bf16.msra.mxu0 %v679
    %921 = vmatprep.subr.bf16.mxu0 %v684
    %922 = vmatpush1.bf16.msra.mxu0 %v683
    %923 = vmatprep.subr.bf16.mxu0 %v688
    %924 = vmatpush1.bf16.msra.mxu0 %v687
    %925 = vmatprep.subr.bf16.mxu0 %v692
    %926 = vmatpush1.bf16.msra.mxu0 %v691
    %927 = vmatprep.subr.bf16.mxu0 %v696
    %928 = vmatpush1.bf16.msra.mxu0 %v695
    %929 = vmatprep.subr.bf16.mxu0 %v700
    %930 = vmatpush1.bf16.msra.mxu0 %v699
    %931 = vmatprep.subr.bf16.mxu0 %v704
    %932 = vmatpush1.bf16.msra.mxu0 %v703
    %933 = vmatprep.subr.bf16.mxu0 %v708
    %934 = vmatpush1.bf16.msra.mxu0 %v707
    %935 = vmatprep.mubr.bf16.mxu0 %v110
    %936 = vmatmul.mubr.bf16.gmra.mrb[0].mxu0 %v109
    %v937 = vpop.f32.mrb[0].mxu0
    %v938 = vadd.f32 %v246, %v937
    %v939 = vpop.f32.mrb[0].mxu0
    %v940 = vadd.f32 %v250, %v939
    %v941 = vpop.f32.mrb[0].mxu0
    %v942 = vadd.f32 %v246, %v941
    %v943 = vpop.f32.mrb[0].mxu0
    %v944 = vadd.f32 %v250, %v943
    %945 = vdwg.mxu0
    %946 = vmatprep.subr.bf16.mxu0 %v712
    %947 = vmatpush1.bf16.msra.mxu0 %v711
    %948 = vmatprep.subr.bf16.mxu0 %v716
    %949 = vmatpush1.bf16.msra.mxu0 %v715
    %950 = vmatprep.subr.bf16.mxu0 %v720
    %951 = vmatpush1.bf16.msra.mxu0 %v719
    %952 = vmatprep.subr.bf16.mxu0 %v724
    %953 = vmatpush1.bf16.msra.mxu0 %v723
    %954 = vmatprep.subr.bf16.mxu0 %v728
    %955 = vmatpush1.bf16.msra.mxu0 %v727
    %956 = vmatprep.subr.bf16.mxu0 %v732
    %957 = vmatpush1.bf16.msra.mxu0 %v731
    %958 = vmatprep.subr.bf16.mxu0 %v736
    %959 = vmatpush1.bf16.msra.mxu0 %v735
    %960 = vmatprep.subr.bf16.mxu0 %v740
    %961 = vmatpush1.bf16.msra.mxu0 %v739
    %962 = vmatprep.subr.bf16.mxu0 %v744
    %963 = vmatpush1.bf16.msra.mxu0 %v743
    %964 = vmatprep.subr.bf16.mxu0 %v748
    %965 = vmatpush1.bf16.msra.mxu0 %v747
    %966 = vmatprep.subr.bf16.mxu0 %v752
    %967 = vmatpush1.bf16.msra.mxu0 %v751
    %968 = vmatprep.subr.bf16.mxu0 %v756
    %969 = vmatpush1.bf16.msra.mxu0 %v755
    %970 = vmatprep.subr.bf16.mxu0 %v760
    %971 = vmatpush1.bf16.msra.mxu0 %v759
    %972 = vmatprep.subr.bf16.mxu0 %v764
    %973 = vmatpush1.bf16.msra.mxu0 %v763
    %974 = vmatprep.subr.bf16.mxu0 %v768
    %975 = vmatpush1.bf16.msra.mxu0 %v767
    %976 = vmatprep.subr.bf16.mxu0 %v772
    %977 = vmatpush1.bf16.msra.mxu0 %v771
    %978 = vmatprep.mubr.bf16.mxu0 %v112
    %979 = vmatmul.mubr.bf16.gmra.mrb[0].mxu0 %v111
    %v980 = vpop.f32.mrb[0].mxu0
    %v981 = vadd.f32 %v938, %v980
    %v982 = vpop.f32.mrb[0].mxu0
    %v983 = vadd.f32 %v940, %v982
    %v984 = vpop.f32.mrb[0].mxu0
    %v985 = vadd.f32 %v942, %v984
    %v986 = vpop.f32.mrb[0].mxu0
    %v987 = vadd.f32 %v944, %v986
    %988 = vdwg.mxu0
    %989 = vmatprep.subr.bf16.mxu0 %v650
    %990 = vmatpush1.bf16.msra.mxu0 %v649
    %991 = vmatprep.subr.bf16.mxu0 %v654
    %992 = vmatpush1.bf16.msra.mxu0 %v653
    %993 = vmatprep.subr.bf16.mxu0 %v658
    %994 = vmatpush1.bf16.msra.mxu0 %v657
    %995 = vmatprep.subr.bf16.mxu0 %v662
    %996 = vmatpush1.bf16.msra.mxu0 %v661
    %997 = vmatprep.subr.bf16.mxu0 %v666
    %998 = vmatpush1.bf16.msra.mxu0 %v665
    %999 = vmatprep.subr.bf16.mxu0 %v670
    %1000 = vmatpush1.bf16.msra.mxu0 %v669
    %1001 = vmatprep.subr.bf16.mxu0 %v674
    %1002 = vmatpush1.bf16.msra.mxu0 %v673
    %1003 = vmatprep.subr.bf16.mxu0 %v678
    %1004 = vmatpush1.bf16.msra.mxu0 %v677
    %1005 = vmatprep.subr.bf16.mxu0 %v682
    %1006 = vmatpush1.bf16.msra.mxu0 %v681
    %1007 = vmatprep.subr.bf16.mxu0 %v686
    %1008 = vmatpush1.bf16.msra.mxu0 %v685
    %1009 = vmatprep.subr.bf16.mxu0 %v690
    %1010 = vmatpush1.bf16.msra.mxu0 %v689
    %1011 = vmatprep.subr.bf16.mxu0 %v694
    %1012 = vmatpush1.bf16.msra.mxu0 %v693
    %1013 = vmatprep.subr.bf16.mxu0 %v698
    %1014 = vmatpush1.bf16.msra.mxu0 %v697
    %1015 = vmatprep.subr.bf16.mxu0 %v702
    %1016 = vmatpush1.bf16.msra.mxu0 %v701
    %1017 = vmatprep.subr.bf16.mxu0 %v706
    %1018 = vmatpush1.bf16.msra.mxu0 %v705
    %1019 = vmatprep.subr.bf16.mxu0 %v710
    %1020 = vmatpush1.bf16.msra.mxu0 %v709
    %1021 = vmatprep.mubr.bf16.mxu0 %v110
    %1022 = vmatmul.mubr.bf16.gmra.mrb[0].mxu0 %v109
    %v1023 = vpop.f32.mrb[0].mxu0
    %v1024 = vadd.f32 %v254, %v1023
    %v1025 = vpop.f32.mrb[0].mxu0
    %v1026 = vadd.f32 %v258, %v1025
    %v1027 = vpop.f32.mrb[0].mxu0
    %v1028 = vadd.f32 %v254, %v1027
    %v1029 = vpop.f32.mrb[0].mxu0
    %v1030 = vadd.f32 %v258, %v1029
    %1031 = vdwg.mxu0
    %1032 = vmatprep.subr.bf16.mxu0 %v714
    %1033 = vmatpush1.bf16.msra.mxu0 %v713
    %1034 = vmatprep.subr.bf16.mxu0 %v718
    %1035 = vmatpush1.bf16.msra.mxu0 %v717
    %1036 = vmatprep.subr.bf16.mxu0 %v722
    %1037 = vmatpush1.bf16.msra.mxu0 %v721
    %1038 = vmatprep.subr.bf16.mxu0 %v726
    %1039 = vmatpush1.bf16.msra.mxu0 %v725
    %1040 = vmatprep.subr.bf16.mxu0 %v730
    %1041 = vmatpush1.bf16.msra.mxu0 %v729
    %1042 = vmatprep.subr.bf16.mxu0 %v734
    %1043 = vmatpush1.bf16.msra.mxu0 %v733
    %1044 = vmatprep.subr.bf16.mxu0 %v738
    %1045 = vmatpush1.bf16.msra.mxu0 %v737
    %1046 = vmatprep.subr.bf16.mxu0 %v742
    %1047 = vmatpush1.bf16.msra.mxu0 %v741
    %1048 = vmatprep.subr.bf16.mxu0 %v746
    %1049 = vmatpush1.bf16.msra.mxu0 %v745
    %1050 = vmatprep.subr.bf16.mxu0 %v750
    %1051 = vmatpush1.bf16.msra.mxu0 %v749
    %1052 = vmatprep.subr.bf16.mxu0 %v754
    %1053 = vmatpush1.bf16.msra.mxu0 %v753
    %1054 = vmatprep.subr.bf16.mxu0 %v758
    %1055 = vmatpush1.bf16.msra.mxu0 %v757
    %1056 = vmatprep.subr.bf16.mxu0 %v762
    %1057 = vmatpush1.bf16.msra.mxu0 %v761
    %1058 = vmatprep.subr.bf16.mxu0 %v766
    %1059 = vmatpush1.bf16.msra.mxu0 %v765
    %1060 = vmatprep.subr.bf16.mxu0 %v770
    %1061 = vmatpush1.bf16.msra.mxu0 %v769
    %1062 = vmatprep.subr.bf16.mxu0 %v774
    %1063 = vmatpush1.bf16.msra.mxu0 %v773
    %1064 = vmatprep.mubr.bf16.mxu0 %v112
    %1065 = vmatmul.mubr.bf16.gmra.mrb[0].mxu0 %v111
    %v1066 = vpop.f32.mrb[0].mxu0
    %v1067 = vadd.f32 %v1024, %v1066
    %v1068 = vpop.f32.mrb[0].mxu0
    %v1069 = vadd.f32 %v1026, %v1068
    %v1070 = vpop.f32.mrb[0].mxu0
    %v1071 = vadd.f32 %v1028, %v1070
    %v1072 = vpop.f32.mrb[0].mxu0
    %v1073 = vadd.f32 %v1030, %v1072
    %1074 = vdwg.mxu0
    %v1075 = vmax.f32 %v981, 0.0
    %v1076 = vmax.f32 %v983, 0.0
    %v1077 = vmax.f32 %v1067, 0.0
    %v1078 = vmax.f32 %v1069, 0.0
    %v1079 = vmax.f32 %v985, 0.0
    %v1080 = vmax.f32 %v987, 0.0
    %v1081 = vmax.f32 %v1071, 0.0
    %v1082 = vmax.f32 %v1073, 0.0
    %v1083 = vpack.c.bf16 %v1079, %v1075
    %v1084 = vpack.c.bf16 %v1080, %v1076
    %v1085 = vpack.c.bf16 %v1081, %v1077
    %v1086 = vpack.c.bf16 %v1082, %v1078
    %1087 = vmatprep.subr.bf16.mxu0 %v1084
    %1088 = vmatpush1.bf16.xpose.msra.mxu0 %v1083
    %1089 = vmatprep.subr.bf16.mxu0 0
    %1090 = vmatpush1.bf16.xpose.msra.mxu0 0
    %1091 = vmatprep.subr.bf16.mxu0 0
    %1092 = vmatpush1.bf16.xpose.msra.mxu0 0
    %1093 = vmatprep.subr.bf16.mxu0 0
    %1094 = vmatpush1.bf16.xpose.msra.mxu0 0
    %1095 = vmatprep.subr.bf16.mxu0 0
    %1096 = vmatpush1.bf16.xpose.msra.mxu0 0
    %1097 = vmatprep.subr.bf16.mxu0 0
    %1098 = vmatpush1.bf16.xpose.msra.mxu0 0
    %1099 = vmatprep.subr.bf16.mxu0 0
    %1100 = vmatpush1.bf16.xpose.msra.mxu0 0
    %1101 = vmatprep.subr.bf16.mxu0 0
    %1102 = vmatpush1.bf16.xpose.msra.mxu0 0
    %1103 = vmatprep.subr.bf16.mxu0 0
    %1104 = vmatpush1.bf16.xpose.msra.mxu0 0
    %1105 = vmatprep.subr.bf16.mxu0 0
    %1106 = vmatpush1.bf16.xpose.msra.mxu0 0
    %1107 = vmatprep.subr.bf16.mxu0 0
    %1108 = vmatpush1.bf16.xpose.msra.mxu0 0
    %1109 = vmatprep.subr.bf16.mxu0 0
    %1110 = vmatpush1.bf16.xpose.msra.mxu0 0
    %1111 = vmatprep.subr.bf16.mxu0 0
    %1112 = vmatpush1.bf16.xpose.msra.mxu0 0
    %1113 = vmatprep.subr.bf16.mxu0 0
    %1114 = vmatpush1.bf16.xpose.msra.mxu0 0
    %1115 = vmatprep.subr.bf16.mxu0 0
    %1116 = vmatpush1.bf16.xpose.msra.mxu0 0
    %1117 = vmatprep.subr.bf16.mxu0 0
    %1118 = vmatpush1.bf16.xpose.msra.mxu0 0
    %1119 = vmatprep.mubr.bf16.mxu0 %v1084
    %1120 = vmatmul.mubr.bf16.gmra.mrb[0].mxu0 %v1083
    %v1121 = vpop.f32.mrb[0].mxu0
    %v1122 = vpop.f32.mrb[0].mxu0
    %v1123 = vpop.f32.mrb[0].mxu0
    %v1124 = vadd.f32 0.0, %v1123
    %v1125 = vpop.f32.mrb[0].mxu0
    %1126 = vdwg.mxu0
    %1127 = vmatprep.subr.bf16.mxu0 %v1086
    %1128 = vmatpush1.bf16.xpose.msra.mxu0 %v1085
    %1129 = vmatprep.subr.bf16.mxu0 0
    %1130 = vmatpush1.bf16.xpose.msra.mxu0 0
    %1131 = vmatprep.subr.bf16.mxu0 0
    %1132 = vmatpush1.bf16.xpose.msra.mxu0 0
    %1133 = vmatprep.subr.bf16.mxu0 0
    %1134 = vmatpush1.bf16.xpose.msra.mxu0 0
    %1135 = vmatprep.subr.bf16.mxu0 0
    %1136 = vmatpush1.bf16.xpose.msra.mxu0 0
    %1137 = vmatprep.subr.bf16.mxu0 0
    %1138 = vmatpush1.bf16.xpose.msra.mxu0 0
    %1139 = vmatprep.subr.bf16.mxu0 0
    %1140 = vmatpush1.bf16.xpose.msra.mxu0 0
    %1141 = vmatprep.subr.bf16.mxu0 0
    %1142 = vmatpush1.bf16.xpose.msra.mxu0 0
    %1143 = vmatprep.subr.bf16.mxu0 0
    %1144 = vmatpush1.bf16.xpose.msra.mxu0 0
    %1145 = vmatprep.subr.bf16.mxu0 0
    %1146 = vmatpush1.bf16.xpose.msra.mxu0 0
    %1147 = vmatprep.subr.bf16.mxu0 0
    %1148 = vmatpush1.bf16.xpose.msra.mxu0 0
    %1149 = vmatprep.subr.bf16.mxu0 0
    %1150 = vmatpush1.bf16.xpose.msra.mxu0 0
    %1151 = vmatprep.subr.bf16.mxu0 0
    %1152 = vmatpush1.bf16.xpose.msra.mxu0 0
    %1153 = vmatprep.subr.bf16.mxu0 0
    %1154 = vmatpush1.bf16.xpose.msra.mxu0 0
    %1155 = vmatprep.subr.bf16.mxu0 0
    %1156 = vmatpush1.bf16.xpose.msra.mxu0 0
    %1157 = vmatprep.subr.bf16.mxu0 0
    %1158 = vmatpush1.bf16.xpose.msra.mxu0 0
    %1159 = vmatprep.mubr.bf16.mxu0 %v1086
    %1160 = vmatmul.mubr.bf16.gmra.mrb[0].mxu0 %v1085
    %v1161 = vpop.f32.mrb[0].mxu0
    %v1162 = vpop.f32.mrb[0].mxu0
    %v1163 = vpop.f32.mrb[0].mxu0
    %v1164 = vadd.f32 %v1124, %v1163
    %v1165 = vpop.f32.mrb[0].mxu0
    %1166 = vdwg.mxu0
    %vm1167 = vcmask 41984
    %v1168 = vsel %vm1167, %v1164, -inf
    %1169 = vmax.xlane.f32.xlu0 %v1168
    %v1170 = vpop.xlane.xlu0 %1169
    %v1171 = vsub.f32 %v1164, %v1170
    %v1172 = vmul.f32 %v1171, 1.442695
    %v1173 = vpow.pop %v1172
    %v1174 = vsel %vm1167, %v1173, 0.0
    %1175 = vadd.xlane.f32.xlu0 %v1174
    %v1176 = vpop.xlane.xlu0 %1175
    %v1177 = vlog2.pop %v1176
    %v1178 = vmul.f32 %v1177, 0.6931472
    %v1179 = vsub.f32 %v1171, %v1178
    %1180 = vst.msk [vmem:[#allocation9] sm:$0x3] %vm1167, %v1179
    // Predicated region
    $region30: #{tpu_custom_call.1} parent=1 // pred_check
      _
    $region31: #{tpu_custom_call.1} parent=1 // pred_check_branch
      %1182 = sbr.rel (0) target = $region33
    $region32: #{tpu_custom_call.1} parent=1 // pred_region
      %s1184 = ssub.s32 32, 32
      %1185 = vsyncadd [#allocation5], %s1184
      %s1187 = sshll.u32 [#allocation9], 4
      %s1188 = int_to_ptr.vmem [resolvable:$true] %s1187
      %1190 = dma.vmem_to_hbm [thread:$0]  %s1188, 32, %s4, [#allocation5]
    $region33: #{tpu_custom_call.1} parent=1 // pred_fallthru
      _
    // Predicated region
    $region34: #{tpu_custom_call.1} parent=1 // pred_check
      _
    $region35: #{tpu_custom_call.1} parent=1 // pred_check_branch
      %1192 = sbr.rel (0) target = $region37
    $region36: #{tpu_custom_call.1} parent=1 // pred_region
      %1193 = dma.done [#allocation5], 32
    $region37: #{tpu_custom_call.1} parent=1 // pred_fallthru
      _
    %1194 = vsyncpa [#allocation4], 1
    %1195 = vsyncpa [#allocation7], 1
    %1196 = vsyncpa [#allocation5], 1

</llo_original>
